<compile_context>
chip_gen: v6e
topology: v6e:2x2x1
jax: 0.10.0
libtpu: 0.0.40
codegen_flags: <defaults>
</compile_context>

<pallas_src>
import functools
import math

import jax
import jax.numpy as jnp
from jax.experimental import pallas as pl
from jax.experimental.pallas import tpu as pltpu


def _conv_bn_silu_kernel(x_ref, w_ref, scale_ref, bias_ref, o_ref,
                         xpad_ref, col_ref, *,
                         K, H, W, Wp, p, slab_len, C_in):
    """One batch element: conv (im2col + 1 matmul) + folded BN + SiLU.

    x_ref:     (1, C_in, H*W)          unpadded input rows, f32
    w_ref:     (C_out, K*K*C_in)       conv weight, bf16, tap-major columns
    scale_ref: (C_out, 1)              folded BN scale = gamma / sqrt(var+eps)
    bias_ref:  (C_out, 1)              folded BN bias  = beta - mean * scale
    o_ref:     (1, C_out, slab_len)    output on padded-width grid (lane-dense)
    xpad_ref:  (C_in, Hp*Wp) f32       VMEM scratch: zero-padded input slab
    col_ref:   (K*K*C_in, slab_len)    VMEM scratch: bf16 im2col slab
    """
    # --- 1) build zero-padded input slab in VMEM (halo stays zero) ----------
    xpad_ref[...] = jnp.zeros_like(xpad_ref)
    for h in range(H):                               # static unroll (small H)
        dst = (h + p) * Wp + p
        xpad_ref[:, dst:dst + W] = x_ref[0, :, h * W:(h + 1) * W]

    # --- 2) im2col: K*K lane-shifted copies stacked on the contraction dim --
    for kh in range(K):
        for kw in range(K):
            t = kh * K + kw
            off = kh * Wp + kw                       # static lane offset
            col_ref[t * C_in:(t + 1) * C_in, :] = (
                xpad_ref[:, off:off + slab_len].astype(col_ref.dtype))

    # --- 3) one bf16 MXU matmul over the folded contraction, f32 accumulate -
    acc = jnp.dot(w_ref[...], col_ref[...], preferred_element_type=jnp.float32)

    # --- 4) folded BN + SiLU fused on the accumulator, lane-dense store -----
    y = acc * scale_ref[...] + bias_ref[...]
    y = y * pl.reciprocal(1.0 + jnp.exp(-y), approx=True)   # SiLU = x*sigmoid(x)
    o_ref[0] = y.astype(o_ref.dtype)


def conv_bn_silu(x, weight, gamma, beta, running_mean, running_var,
                 *, eps=1e-3):
    """Pallas equivalent of Conv.forward: conv2d(bias=False) -> BN(eval) -> SiLU.

    x:      (N, C_in, H, W)        NCHW, f32
    weight: (C_out, C_in, K, K)    odd K, stride=1, 'same' padding
    gamma/beta/running_mean/running_var: (C_out,)
    returns (N, C_out, H, W)
    """
    N, C_in, H, W = x.shape
    C_out, C_in_w, K, K2 = weight.shape
    assert C_in == C_in_w and K == K2 and K % 2 == 1, "odd square kernel expected"
    p = K // 2                                    # auto_pad for stride=1 -> 'same'

    # Padded width: at least W+2p, rounded up so slab_len = H*Wp % 128 == 0
    # (unmasked lane-dense stores). Falls back if the rounding is pathological.
    Wp_min = W + 2 * p
    g = 128 // math.gcd(H, 128)
    Wp = -(-Wp_min // g) * g
    if Wp > 2 * Wp_min:
        Wp = Wp_min                               # accept masked tail stores
    Hp = H + 2 * p + 1                            # +1 row so every shifted slab
    L_pad = Hp * Wp                               #  of length H*Wp is in bounds
    slab_len = H * Wp

    # Unpadded input, spatial dims flattened (free reshape; stays f32 in HBM).
    x_flat = x.reshape(N, C_in, H * W)

    # Weight: (C_out, K*K*C_in), column index = (kh*K + kw)*C_in + c, bf16.
    w_flat = (jnp.transpose(weight, (0, 2, 3, 1))
              .reshape(C_out, K * K * C_in)
              .astype(jnp.bfloat16))

    # Fold BatchNorm (inference) into per-channel scale/bias (f32).
    inv = (gamma / jnp.sqrt(running_var + eps)).astype(jnp.float32)
    scale = inv.reshape(C_out, 1)
    bias = (beta.astype(jnp.float32) -
            running_mean.astype(jnp.float32) * inv).reshape(C_out, 1)

    kernel = functools.partial(_conv_bn_silu_kernel,
                               K=K, H=H, W=W, Wp=Wp, p=p,
                               slab_len=slab_len, C_in=C_in)

    in_specs = [
        pl.BlockSpec((1, C_in, H * W), lambda n: (n, 0, 0)),       # per-n input
        pl.BlockSpec((C_out, K * K * C_in), lambda n: (0, 0)),     # resident weight
        pl.BlockSpec((C_out, 1), lambda n: (0, 0)),                # BN scale
        pl.BlockSpec((C_out, 1), lambda n: (0, 0)),                # BN bias
    ]
    out_specs = pl.BlockSpec((1, C_out, slab_len), lambda n: (n, 0, 0))

    cost = pl.CostEstimate(
        flops=int(2 * N * C_out * K * K * C_in * slab_len),
        transcendentals=int(N * C_out * slab_len),
        bytes_accessed=int(4 * N * C_in * H * W            # x f32 in
                           + 2 * C_out * K * K * C_in      # weight bf16
                           + 2 * 4 * C_out                 # scale + bias f32
                           + 4 * N * C_out * slab_len),    # output f32
    )

    # TODO(synk): for production shapes (e.g. C=256, 80x80) add C_out and/or
    # row-slab grid axes (both 'parallel') so the VMEM working set stays under
    # the v7x 64 MiB budget and both v7x TensorCores get work even at N=1.
    out_flat = pl.pallas_call(
        kernel,
        out_shape=jax.ShapeDtypeStruct((N, C_out, slab_len), x.dtype),
        grid_spec=pltpu.PrefetchScalarGridSpec(
            num_scalar_prefetch=0,
            grid=(N,),
            in_specs=in_specs,
            out_specs=out_specs,
            scratch_shapes=[
                pltpu.VMEM((C_in, L_pad), jnp.float32),          # padded slab
                pltpu.VMEM((K * K * C_in, slab_len), jnp.bfloat16),  # im2col
            ],
        ),
        compiler_params=pltpu.CompilerParams(
            dimension_semantics=("parallel",),
            vmem_limit_bytes=32 * 1024 * 1024,
        ),
        cost_estimate=cost,
    )(x_flat, w_flat, scale, bias)

    # Output lanes live on the padded-width grid; drop the junk columns.
    # TODO(synk): in production keep the padded-lane layout and fuse this crop
    # into the consumer to avoid the extra HBM pass.
    return out_flat.reshape(N, C_out, H, Wp)[:, :, :, :W]


if __name__ == "__main__":
    key = jax.random.PRNGKey(0)
    kx, kw, kg, kb, km, kv = jax.random.split(key, 6)

    # Small shapes consistent with the module: batch=2, in=4, out=8, 16x16, 3x3.
    N, C_in, C_out, H, W, K = 2, 4, 8, 16, 16, 3
    eps = 1e-3

    x = jax.random.normal(kx, (N, C_in, H, W), dtype=jnp.float32)
    weight = jax.random.normal(kw, (C_out, C_in, K, K), dtype=jnp.float32) * 0.1
    gamma = jax.random.uniform(kg, (C_out,), dtype=jnp.float32,
                               minval=0.5, maxval=1.5)
    beta = jax.random.normal(kb, (C_out,), dtype=jnp.float32) * 0.1
    running_mean = jax.random.normal(km, (C_out,), dtype=jnp.float32) * 0.1
    running_var = jax.random.uniform(kv, (C_out,), dtype=jnp.float32,
                                     minval=0.5, maxval=1.5)

    out = conv_bn_silu(x, weight, gamma, beta, running_mean, running_var, eps=eps)
    out = jax.block_until_ready(out)

    # Reference: XLA conv (full f32) + eval-mode BN + SiLU.
    p = K // 2
    ref = jax.lax.conv_general_dilated(
        x, weight, window_strides=(1, 1), padding=[(p, p), (p, p)],
        dimension_numbers=("NCHW", "OIHW", "NCHW"))
    inv = gamma / jnp.sqrt(running_var + eps)
    ref = ref * inv[None, :, None, None] + (beta - running_mean * inv)[None, :, None, None]
    ref = ref * jax.nn.sigmoid(ref)

    assert out.shape == (N, C_out, H, W)
    # bf16 MXU operands with f32 accumulation: tolerance loosened vs f32 path.
    max_err = float(jnp.max(jnp.abs(out - ref)))
    assert max_err < 5e-2, f"mismatch vs reference, max abs err = {max_err}"

    # TODO(synk): training-mode BatchNorm (batch statistics + running-stat
    # update) is not implemented; eval-mode BN is folded into scale/bias.
    print("KERNEL_OK")
</pallas_src>

<mosaic_0001>
module attributes {stable_mosaic.version = 11 : i64} {
  func.func @_conv_bn_silu_kernel(%arg0: i32, %arg1: memref<1x4x256xf32, #tpu.memory_space<vmem>>, %arg2: memref<8x36xbf16, #tpu.memory_space<vmem>>, %arg3: memref<8x1xf32, #tpu.memory_space<vmem>>, %arg4: memref<8x1xf32, #tpu.memory_space<vmem>>, %arg5: memref<1x8x384xf32, #tpu.memory_space<vmem>>, %arg6: memref<4x456xf32, #tpu.memory_space<vmem>>, %arg7: memref<36x384xbf16, #tpu.memory_space<vmem>>) attributes {dimension_semantics = [#tpu.dimension_semantics<parallel>], iteration_bounds = array<i64: 2>, scalar_prefetch = 0 : i64, scratch_operands = 2 : i64, tpu.core_type = #tpu.core_type<tc>, window_params = [{transform_indices = @transform_0, window_bounds = array<i64: 1, 4, 256>}, {pipeline_mode = #tpu.pipeline_mode<synchronous>, transform_indices = @transform_1, window_bounds = array<i64: 8, 36>}, {pipeline_mode = #tpu.pipeline_mode<synchronous>, transform_indices = @transform_2, window_bounds = array<i64: 8, 1>}, {pipeline_mode = #tpu.pipeline_mode<synchronous>, transform_indices = @transform_3, window_bounds = array<i64: 8, 1>}, {transform_indices = @transform_4, window_bounds = array<i64: 1, 8, 384>}]} {
    %cst = arith.constant 0.000000e+00 : f32
    %0 = vector.broadcast %cst : f32 to vector<4x456xf32>
    %c0 = arith.constant 0 : index
    %c0_0 = arith.constant 0 : index
    %1 = vector.load %arg6[%c0, %c0_0] : memref<4x456xf32, #tpu.memory_space<vmem>>, vector<4x456xf32>
    tpu.vector_store %arg6[%c0, %c0_0], %0 {strides = array<i32>} : memref<4x456xf32, #tpu.memory_space<vmem>>, vector<4x456xf32>,
    %c0_1 = arith.constant 0 : index
    %c0_2 = arith.constant 0 : index
    %c0_3 = arith.constant 0 : index
    %2 = vector.load %arg1[%c0_1, %c0_2, %c0_3] : memref<1x4x256xf32, #tpu.memory_space<vmem>>, vector<1x4x16xf32>
    %3 = vector.shape_cast %2 : vector<1x4x16xf32> to vector<4x16xf32>
    %c0_4 = arith.constant 0 : index
    %c25 = arith.constant 25 : index
    %4 = vector.load %arg6[%c0_4, %c25] : memref<4x456xf32, #tpu.memory_space<vmem>>, vector<4x16xf32>
    tpu.vector_store %arg6[%c0_4, %c25], %3 {strides = array<i32>} : memref<4x456xf32, #tpu.memory_space<vmem>>, vector<4x16xf32>,
    %c0_5 = arith.constant 0 : index
    %c0_6 = arith.constant 0 : index
    %c16 = arith.constant 16 : index
    %5 = vector.load %arg1[%c0_5, %c0_6, %c16] : memref<1x4x256xf32, #tpu.memory_space<vmem>>, vector<1x4x16xf32>
    %6 = vector.shape_cast %5 : vector<1x4x16xf32> to vector<4x16xf32>
    %c0_7 = arith.constant 0 : index
    %c49 = arith.constant 49 : index
    %7 = vector.load %arg6[%c0_7, %c49] : memref<4x456xf32, #tpu.memory_space<vmem>>, vector<4x16xf32>
    tpu.vector_store %arg6[%c0_7, %c49], %6 {strides = array<i32>} : memref<4x456xf32, #tpu.memory_space<vmem>>, vector<4x16xf32>,
    %c0_8 = arith.constant 0 : index
    %c0_9 = arith.constant 0 : index
    %c32 = arith.constant 32 : index
    %8 = vector.load %arg1[%c0_8, %c0_9, %c32] : memref<1x4x256xf32, #tpu.memory_space<vmem>>, vector<1x4x16xf32>
    %9 = vector.shape_cast %8 : vector<1x4x16xf32> to vector<4x16xf32>
    %c0_10 = arith.constant 0 : index
    %c73 = arith.constant 73 : index
    %10 = vector.load %arg6[%c0_10, %c73] : memref<4x456xf32, #tpu.memory_space<vmem>>, vector<4x16xf32>
    tpu.vector_store %arg6[%c0_10, %c73], %9 {strides = array<i32>} : memref<4x456xf32, #tpu.memory_space<vmem>>, vector<4x16xf32>,
    %c0_11 = arith.constant 0 : index
    %c0_12 = arith.constant 0 : index
    %c48 = arith.constant 48 : index
    %11 = vector.load %arg1[%c0_11, %c0_12, %c48] : memref<1x4x256xf32, #tpu.memory_space<vmem>>, vector<1x4x16xf32>
    %12 = vector.shape_cast %11 : vector<1x4x16xf32> to vector<4x16xf32>
    %c0_13 = arith.constant 0 : index
    %c97 = arith.constant 97 : index
    %13 = vector.load %arg6[%c0_13, %c97] : memref<4x456xf32, #tpu.memory_space<vmem>>, vector<4x16xf32>
    tpu.vector_store %arg6[%c0_13, %c97], %12 {strides = array<i32>} : memref<4x456xf32, #tpu.memory_space<vmem>>, vector<4x16xf32>,
    %c0_14 = arith.constant 0 : index
    %c0_15 = arith.constant 0 : index
    %c64 = arith.constant 64 : index
    %14 = vector.load %arg1[%c0_14, %c0_15, %c64] : memref<1x4x256xf32, #tpu.memory_space<vmem>>, vector<1x4x16xf32>
    %15 = vector.shape_cast %14 : vector<1x4x16xf32> to vector<4x16xf32>
    %c0_16 = arith.constant 0 : index
    %c121 = arith.constant 121 : index
    %16 = vector.load %arg6[%c0_16, %c121] : memref<4x456xf32, #tpu.memory_space<vmem>>, vector<4x16xf32>
    tpu.vector_store %arg6[%c0_16, %c121], %15 {strides = array<i32>} : memref<4x456xf32, #tpu.memory_space<vmem>>, vector<4x16xf32>,
    %c0_17 = arith.constant 0 : index
    %c0_18 = arith.constant 0 : index
    %c80 = arith.constant 80 : index
    %17 = vector.load %arg1[%c0_17, %c0_18, %c80] : memref<1x4x256xf32, #tpu.memory_space<vmem>>, vector<1x4x16xf32>
    %18 = vector.shape_cast %17 : vector<1x4x16xf32> to vector<4x16xf32>
    %c0_19 = arith.constant 0 : index
    %c145 = arith.constant 145 : index
    %19 = vector.load %arg6[%c0_19, %c145] : memref<4x456xf32, #tpu.memory_space<vmem>>, vector<4x16xf32>
    tpu.vector_store %arg6[%c0_19, %c145], %18 {strides = array<i32>} : memref<4x456xf32, #tpu.memory_space<vmem>>, vector<4x16xf32>,
    %c0_20 = arith.constant 0 : index
    %c0_21 = arith.constant 0 : index
    %c96 = arith.constant 96 : index
    %20 = vector.load %arg1[%c0_20, %c0_21, %c96] : memref<1x4x256xf32, #tpu.memory_space<vmem>>, vector<1x4x16xf32>
    %21 = vector.shape_cast %20 : vector<1x4x16xf32> to vector<4x16xf32>
    %c0_22 = arith.constant 0 : index
    %c169 = arith.constant 169 : index
    %22 = vector.load %arg6[%c0_22, %c169] : memref<4x456xf32, #tpu.memory_space<vmem>>, vector<4x16xf32>
    tpu.vector_store %arg6[%c0_22, %c169], %21 {strides = array<i32>} : memref<4x456xf32, #tpu.memory_space<vmem>>, vector<4x16xf32>,
    %c0_23 = arith.constant 0 : index
    %c0_24 = arith.constant 0 : index
    %c112 = arith.constant 112 : index
    %23 = vector.load %arg1[%c0_23, %c0_24, %c112] : memref<1x4x256xf32, #tpu.memory_space<vmem>>, vector<1x4x16xf32>
    %24 = vector.shape_cast %23 : vector<1x4x16xf32> to vector<4x16xf32>
    %c0_25 = arith.constant 0 : index
    %c193 = arith.constant 193 : index
    %25 = vector.load %arg6[%c0_25, %c193] : memref<4x456xf32, #tpu.memory_space<vmem>>, vector<4x16xf32>
    tpu.vector_store %arg6[%c0_25, %c193], %24 {strides = array<i32>} : memref<4x456xf32, #tpu.memory_space<vmem>>, vector<4x16xf32>,
    %c0_26 = arith.constant 0 : index
    %c0_27 = arith.constant 0 : index
    %c128 = arith.constant 128 : index
    %26 = vector.load %arg1[%c0_26, %c0_27, %c128] : memref<1x4x256xf32, #tpu.memory_space<vmem>>, vector<1x4x16xf32>
    %27 = vector.shape_cast %26 : vector<1x4x16xf32> to vector<4x16xf32>
    %c0_28 = arith.constant 0 : index
    %c217 = arith.constant 217 : index
    %28 = vector.load %arg6[%c0_28, %c217] : memref<4x456xf32, #tpu.memory_space<vmem>>, vector<4x16xf32>
    tpu.vector_store %arg6[%c0_28, %c217], %27 {strides = array<i32>} : memref<4x456xf32, #tpu.memory_space<vmem>>, vector<4x16xf32>,
    %c0_29 = arith.constant 0 : index
    %c0_30 = arith.constant 0 : index
    %c144 = arith.constant 144 : index
    %29 = vector.load %arg1[%c0_29, %c0_30, %c144] : memref<1x4x256xf32, #tpu.memory_space<vmem>>, vector<1x4x16xf32>
    %30 = vector.shape_cast %29 : vector<1x4x16xf32> to vector<4x16xf32>
    %c0_31 = arith.constant 0 : index
    %c241 = arith.constant 241 : index
    %31 = vector.load %arg6[%c0_31, %c241] : memref<4x456xf32, #tpu.memory_space<vmem>>, vector<4x16xf32>
    tpu.vector_store %arg6[%c0_31, %c241], %30 {strides = array<i32>} : memref<4x456xf32, #tpu.memory_space<vmem>>, vector<4x16xf32>,
    %c0_32 = arith.constant 0 : index
    %c0_33 = arith.constant 0 : index
    %c160 = arith.constant 160 : index
    %32 = vector.load %arg1[%c0_32, %c0_33, %c160] : memref<1x4x256xf32, #tpu.memory_space<vmem>>, vector<1x4x16xf32>
    %33 = vector.shape_cast %32 : vector<1x4x16xf32> to vector<4x16xf32>
    %c0_34 = arith.constant 0 : index
    %c265 = arith.constant 265 : index
    %34 = vector.load %arg6[%c0_34, %c265] : memref<4x456xf32, #tpu.memory_space<vmem>>, vector<4x16xf32>
    tpu.vector_store %arg6[%c0_34, %c265], %33 {strides = array<i32>} : memref<4x456xf32, #tpu.memory_space<vmem>>, vector<4x16xf32>,
    %c0_35 = arith.constant 0 : index
    %c0_36 = arith.constant 0 : index
    %c176 = arith.constant 176 : index
    %35 = vector.load %arg1[%c0_35, %c0_36, %c176] : memref<1x4x256xf32, #tpu.memory_space<vmem>>, vector<1x4x16xf32>
    %36 = vector.shape_cast %35 : vector<1x4x16xf32> to vector<4x16xf32>
    %c0_37 = arith.constant 0 : index
    %c289 = arith.constant 289 : index
    %37 = vector.load %arg6[%c0_37, %c289] : memref<4x456xf32, #tpu.memory_space<vmem>>, vector<4x16xf32>
    tpu.vector_store %arg6[%c0_37, %c289], %36 {strides = array<i32>} : memref<4x456xf32, #tpu.memory_space<vmem>>, vector<4x16xf32>,
    %c0_38 = arith.constant 0 : index
    %c0_39 = arith.constant 0 : index
    %c192 = arith.constant 192 : index
    %38 = vector.load %arg1[%c0_38, %c0_39, %c192] : memref<1x4x256xf32, #tpu.memory_space<vmem>>, vector<1x4x16xf32>
    %39 = vector.shape_cast %38 : vector<1x4x16xf32> to vector<4x16xf32>
    %c0_40 = arith.constant 0 : index
    %c313 = arith.constant 313 : index
    %40 = vector.load %arg6[%c0_40, %c313] : memref<4x456xf32, #tpu.memory_space<vmem>>, vector<4x16xf32>
    tpu.vector_store %arg6[%c0_40, %c313], %39 {strides = array<i32>} : memref<4x456xf32, #tpu.memory_space<vmem>>, vector<4x16xf32>,
    %c0_41 = arith.constant 0 : index
    %c0_42 = arith.constant 0 : index
    %c208 = arith.constant 208 : index
    %41 = vector.load %arg1[%c0_41, %c0_42, %c208] : memref<1x4x256xf32, #tpu.memory_space<vmem>>, vector<1x4x16xf32>
    %42 = vector.shape_cast %41 : vector<1x4x16xf32> to vector<4x16xf32>
    %c0_43 = arith.constant 0 : index
    %c337 = arith.constant 337 : index
    %43 = vector.load %arg6[%c0_43, %c337] : memref<4x456xf32, #tpu.memory_space<vmem>>, vector<4x16xf32>
    tpu.vector_store %arg6[%c0_43, %c337], %42 {strides = array<i32>} : memref<4x456xf32, #tpu.memory_space<vmem>>, vector<4x16xf32>,
    %c0_44 = arith.constant 0 : index
    %c0_45 = arith.constant 0 : index
    %c224 = arith.constant 224 : index
    %44 = vector.load %arg1[%c0_44, %c0_45, %c224] : memref<1x4x256xf32, #tpu.memory_space<vmem>>, vector<1x4x16xf32>
    %45 = vector.shape_cast %44 : vector<1x4x16xf32> to vector<4x16xf32>
    %c0_46 = arith.constant 0 : index
    %c361 = arith.constant 361 : index
    %46 = vector.load %arg6[%c0_46, %c361] : memref<4x456xf32, #tpu.memory_space<vmem>>, vector<4x16xf32>
    tpu.vector_store %arg6[%c0_46, %c361], %45 {strides = array<i32>} : memref<4x456xf32, #tpu.memory_space<vmem>>, vector<4x16xf32>,
    %c0_47 = arith.constant 0 : index
    %c0_48 = arith.constant 0 : index
    %c240 = arith.constant 240 : index
    %47 = vector.load %arg1[%c0_47, %c0_48, %c240] : memref<1x4x256xf32, #tpu.memory_space<vmem>>, vector<1x4x16xf32>
    %48 = vector.shape_cast %47 : vector<1x4x16xf32> to vector<4x16xf32>
    %c0_49 = arith.constant 0 : index
    %c385 = arith.constant 385 : index
    %49 = vector.load %arg6[%c0_49, %c385] : memref<4x456xf32, #tpu.memory_space<vmem>>, vector<4x16xf32>
    tpu.vector_store %arg6[%c0_49, %c385], %48 {strides = array<i32>} : memref<4x456xf32, #tpu.memory_space<vmem>>, vector<4x16xf32>,
    %c0_50 = arith.constant 0 : index
    %c0_51 = arith.constant 0 : index
    %50 = vector.load %arg6[%c0_50, %c0_51] : memref<4x456xf32, #tpu.memory_space<vmem>>, vector<4x384xf32>
    %51 = arith.truncf %50 : vector<4x384xf32> to vector<4x384xbf16>
    %c0_52 = arith.constant 0 : index
    %c0_53 = arith.constant 0 : index
    %52 = vector.load %arg7[%c0_52, %c0_53] : memref<36x384xbf16, #tpu.memory_space<vmem>>, vector<4x384xbf16>
    tpu.vector_store %arg7[%c0_52, %c0_53], %51 {strides = array<i32>} : memref<36x384xbf16, #tpu.memory_space<vmem>>, vector<4x384xbf16>,
    %c0_54 = arith.constant 0 : index
    %c1 = arith.constant 1 : index
    %53 = vector.load %arg6[%c0_54, %c1] : memref<4x456xf32, #tpu.memory_space<vmem>>, vector<4x384xf32>
    %54 = arith.truncf %53 : vector<4x384xf32> to vector<4x384xbf16>
    %c4 = arith.constant 4 : index
    %c0_55 = arith.constant 0 : index
    %55 = vector.load %arg7[%c4, %c0_55] : memref<36x384xbf16, #tpu.memory_space<vmem>>, vector<4x384xbf16>
    tpu.vector_store %arg7[%c4, %c0_55], %54 {strides = array<i32>} : memref<36x384xbf16, #tpu.memory_space<vmem>>, vector<4x384xbf16>,
    %c0_56 = arith.constant 0 : index
    %c2 = arith.constant 2 : index
    %56 = vector.load %arg6[%c0_56, %c2] : memref<4x456xf32, #tpu.memory_space<vmem>>, vector<4x384xf32>
    %57 = arith.truncf %56 : vector<4x384xf32> to vector<4x384xbf16>
    %c8 = arith.constant 8 : index
    %c0_57 = arith.constant 0 : index
    %58 = vector.load %arg7[%c8, %c0_57] : memref<36x384xbf16, #tpu.memory_space<vmem>>, vector<4x384xbf16>
    tpu.vector_store %arg7[%c8, %c0_57], %57 {strides = array<i32>} : memref<36x384xbf16, #tpu.memory_space<vmem>>, vector<4x384xbf16>,
    %c0_58 = arith.constant 0 : index
    %c24 = arith.constant 24 : index
    %59 = vector.load %arg6[%c0_58, %c24] : memref<4x456xf32, #tpu.memory_space<vmem>>, vector<4x384xf32>
    %60 = arith.truncf %59 : vector<4x384xf32> to vector<4x384xbf16>
    %c12 = arith.constant 12 : index
    %c0_59 = arith.constant 0 : index
    %61 = vector.load %arg7[%c12, %c0_59] : memref<36x384xbf16, #tpu.memory_space<vmem>>, vector<4x384xbf16>
    tpu.vector_store %arg7[%c12, %c0_59], %60 {strides = array<i32>} : memref<36x384xbf16, #tpu.memory_space<vmem>>, vector<4x384xbf16>,
    %c0_60 = arith.constant 0 : index
    %c25_61 = arith.constant 25 : index
    %62 = vector.load %arg6[%c0_60, %c25_61] : memref<4x456xf32, #tpu.memory_space<vmem>>, vector<4x384xf32>
    %63 = arith.truncf %62 : vector<4x384xf32> to vector<4x384xbf16>
    %c16_62 = arith.constant 16 : index
    %c0_63 = arith.constant 0 : index
    %64 = vector.load %arg7[%c16_62, %c0_63] : memref<36x384xbf16, #tpu.memory_space<vmem>>, vector<4x384xbf16>
    tpu.vector_store %arg7[%c16_62, %c0_63], %63 {strides = array<i32>} : memref<36x384xbf16, #tpu.memory_space<vmem>>, vector<4x384xbf16>,
    %c0_64 = arith.constant 0 : index
    %c26 = arith.constant 26 : index
    %65 = vector.load %arg6[%c0_64, %c26] : memref<4x456xf32, #tpu.memory_space<vmem>>, vector<4x384xf32>
    %66 = arith.truncf %65 : vector<4x384xf32> to vector<4x384xbf16>
    %c20 = arith.constant 20 : index
    %c0_65 = arith.constant 0 : index
    %67 = vector.load %arg7[%c20, %c0_65] : memref<36x384xbf16, #tpu.memory_space<vmem>>, vector<4x384xbf16>
    tpu.vector_store %arg7[%c20, %c0_65], %66 {strides = array<i32>} : memref<36x384xbf16, #tpu.memory_space<vmem>>, vector<4x384xbf16>,
    %c0_66 = arith.constant 0 : index
    %c48_67 = arith.constant 48 : index
    %68 = vector.load %arg6[%c0_66, %c48_67] : memref<4x456xf32, #tpu.memory_space<vmem>>, vector<4x384xf32>
    %69 = arith.truncf %68 : vector<4x384xf32> to vector<4x384xbf16>
    %c24_68 = arith.constant 24 : index
    %c0_69 = arith.constant 0 : index
    %70 = vector.load %arg7[%c24_68, %c0_69] : memref<36x384xbf16, #tpu.memory_space<vmem>>, vector<4x384xbf16>
    tpu.vector_store %arg7[%c24_68, %c0_69], %69 {strides = array<i32>} : memref<36x384xbf16, #tpu.memory_space<vmem>>, vector<4x384xbf16>,
    %c0_70 = arith.constant 0 : index
    %c49_71 = arith.constant 49 : index
    %71 = vector.load %arg6[%c0_70, %c49_71] : memref<4x456xf32, #tpu.memory_space<vmem>>, vector<4x384xf32>
    %72 = arith.truncf %71 : vector<4x384xf32> to vector<4x384xbf16>
    %c28 = arith.constant 28 : index
    %c0_72 = arith.constant 0 : index
    %73 = vector.load %arg7[%c28, %c0_72] : memref<36x384xbf16, #tpu.memory_space<vmem>>, vector<4x384xbf16>
    tpu.vector_store %arg7[%c28, %c0_72], %72 {strides = array<i32>} : memref<36x384xbf16, #tpu.memory_space<vmem>>, vector<4x384xbf16>,
    %c0_73 = arith.constant 0 : index
    %c50 = arith.constant 50 : index
    %74 = vector.load %arg6[%c0_73, %c50] : memref<4x456xf32, #tpu.memory_space<vmem>>, vector<4x384xf32>
    %75 = arith.truncf %74 : vector<4x384xf32> to vector<4x384xbf16>
    %c32_74 = arith.constant 32 : index
    %c0_75 = arith.constant 0 : index
    %76 = vector.load %arg7[%c32_74, %c0_75] : memref<36x384xbf16, #tpu.memory_space<vmem>>, vector<4x384xbf16>
    tpu.vector_store %arg7[%c32_74, %c0_75], %75 {strides = array<i32>} : memref<36x384xbf16, #tpu.memory_space<vmem>>, vector<4x384xbf16>,
    %c0_76 = arith.constant 0 : index
    %c0_77 = arith.constant 0 : index
    %77 = vector.load %arg2[%c0_76, %c0_77] : memref<8x36xbf16, #tpu.memory_space<vmem>>, vector<8x36xbf16>
    %c0_78 = arith.constant 0 : index
    %c0_79 = arith.constant 0 : index
    %78 = vector.load %arg7[%c0_78, %c0_79] : memref<36x384xbf16, #tpu.memory_space<vmem>>, vector<36x384xbf16>
    %cst_80 = arith.constant dense<0.000000e+00> : vector<8x384xf32>
    %79 = tpu.matmul %77, %78, %cst_80 {dimension_numbers = #tpu.dot_dimension_numbers<[1], [0], [0], [1], [0, 0, 1, 1], [], []>} : vector<8x36xbf16>, vector<36x384xbf16>, vector<8x384xf32> -> vector<8x384xf32>
    %c0_81 = arith.constant 0 : index
    %c0_82 = arith.constant 0 : index
    %80 = vector.load %arg3[%c0_81, %c0_82] : memref<8x1xf32, #tpu.memory_space<vmem>>, vector<8x1xf32>
    %81 = vector.broadcast %80 : vector<8x1xf32> to vector<8x384xf32>
    %82 = arith.mulf %79, %81 : vector<8x384xf32>
    %c0_83 = arith.constant 0 : index
    %c0_84 = arith.constant 0 : index
    %83 = vector.load %arg4[%c0_83, %c0_84] : memref<8x1xf32, #tpu.memory_space<vmem>>, vector<8x1xf32>
    %84 = vector.broadcast %83 : vector<8x1xf32> to vector<8x384xf32>
    %85 = arith.addf %82, %84 : vector<8x384xf32>
    %cst_85 = arith.constant 0.000000e+00 : f32
    %86 = vector.broadcast %cst_85 : f32 to vector<8x384xf32>
    %87 = arith.subf %86, %85 : vector<8x384xf32>
    %88 = math.exp %87 : vector<8x384xf32>
    %cst_86 = arith.constant 1.000000e+00 : f32
    %89 = vector.broadcast %cst_86 : f32 to vector<8x384xf32>
    %90 = arith.addf %89, %88 : vector<8x384xf32>
    %91 = tpu.reciprocal %90 {approx = true} : vector<8x384xf32> -> vector<8x384xf32>
    %92 = arith.mulf %85, %91 : vector<8x384xf32>
    %c0_87 = arith.constant 0 : index
    %c0_88 = arith.constant 0 : index
    %c0_89 = arith.constant 0 : index
    %93 = vector.load %arg5[%c0_87, %c0_88, %c0_89] : memref<1x8x384xf32, #tpu.memory_space<vmem>>, vector<1x8x384xf32>
    %94 = vector.shape_cast %93 : vector<1x8x384xf32> to vector<8x384xf32>
    %95 = vector.shape_cast %92 : vector<8x384xf32> to vector<1x8x384xf32>
    tpu.vector_store %arg5[%c0_87, %c0_88, %c0_89], %95 {strides = array<i32>} : memref<1x8x384xf32, #tpu.memory_space<vmem>>, vector<1x8x384xf32>,
    return
  }
  func.func @transform_0(%arg0: i32) -> (i32, i32, i32) {
    %c0_i32 = arith.constant 0 : i32
    %c0_i32_0 = arith.constant 0 : i32
    %c0_i32_1 = arith.constant 0 : i32
    return %arg0, %c0_i32, %c0_i32_0 : i32, i32, i32
  }
  func.func @transform_1(%arg0: i32) -> (i32, i32) {
    %c0_i32 = arith.constant 0 : i32
    %c0_i32_0 = arith.constant 0 : i32
    %c0_i32_1 = arith.constant 0 : i32
    return %c0_i32, %c0_i32_0 : i32, i32
  }
  func.func @transform_2(%arg0: i32) -> (i32, i32) {
    %c0_i32 = arith.constant 0 : i32
    %c0_i32_0 = arith.constant 0 : i32
    %c0_i32_1 = arith.constant 0 : i32
    return %c0_i32, %c0_i32_0 : i32, i32
  }
  func.func @transform_3(%arg0: i32) -> (i32, i32) {
    %c0_i32 = arith.constant 0 : i32
    %c0_i32_0 = arith.constant 0 : i32
    %c0_i32_1 = arith.constant 0 : i32
    return %c0_i32, %c0_i32_0 : i32, i32
  }
  func.func @transform_4(%arg0: i32) -> (i32, i32, i32) {
    %c0_i32 = arith.constant 0 : i32
    %c0_i32_0 = arith.constant 0 : i32
    %c0_i32_1 = arith.constant 0 : i32
    return %arg0, %c0_i32, %c0_i32_0 : i32, i32, i32
  }
}

</mosaic_0001>

<llo_original>
// kernel: tpu_custom_call.1
$region0: #{tpu_custom_call.1}
  #allocation0 [shape = 'u32[]', space=smem, size = 0x4, offset = 0x4, fixed_abs, tag = 'smem constant byte address 0x4 - core index']
  #allocation1 [shape = 'u32[144,128]{1,0:T(1,128)}', space=vmem, size = 0x12000, scoped, tag = 'internal scratch']
  #allocation2 [shape = 'f32[4,456]{1,0:T(4,128)}', space=vmem, size = 0x2000, scoped, tag = 'scratch operand']
  #allocation3 [shape = 'bf16[36,384]{1,0:T(8,128)(2,1)}', space=vmem, size = 0x7800, scoped, tag = 'scratch operand']
  %s0 = inlined_call_operand.vmem [shape: f32[2,4,256], index: 0, kind: input, shape index: {}]
  %s1 = inlined_call_operand.hbm [shape: bf16[8,36], index: 1, kind: input, shape index: {}]
  %s2 = inlined_call_operand.vmem [shape: f32[8,1], index: 2, kind: input, shape index: {}]
  %s3 = inlined_call_operand.vmem [shape: f32[8,1], index: 3, kind: input, shape index: {}]
  %s4 = inlined_call_operand.hbm [shape: f32[2,8,384], index: 4, kind: output, shape index: {}]
  %s5 = sld [smem:[#allocation0]]
  $region53: #{tpu_custom_call.1} parent=0
    _
  %s7 = ssub.s32 1, %s5
  %s8 = scalar_select 0, %s7, %s5
  $region1: #{tpu_custom_call.1} parent=0
    #allocation4 [shape = 'u8[2048]{0}', space=vmem, size = 0x800, scoped, tag = 'input window, operand 1, single buffered']
    #allocation5 [shape = 's32[2]{0}', space=sflag, size = 0x8, scoped, tag = 'scoped memory for tpu_custom_call.1']
    #allocation6 [shape = 's32[2]{0}', space=sflag, size = 0x8, scoped, tag = 'scoped memory for tpu_custom_call.1']
    #allocation7 [shape = 'u8[24576]{0}', space=vmem, size = 0x6000, scoped, tag = 'output window, operand 0']
    %9 = vsyncpa [#allocation5], 0
    %10 = vsyncpa [#allocation6], 0
    %s11 = scalar_lea.sflag [#allocation6], 1
    %12 = vsyncpa %s11, 0
    loop: start=0, step=1, limit=4
    $region2: #{tpu_custom_call.1} parent=1 // loop_pre_header
      _
    $region3: #{tpu_custom_call.1} parent=1 // loop_header
      %s14 = sphi 0, %s18
      %p15 = scmp.ge.s32.totalorder %s14, 4
      %s24 = sphi 0, %s26
      %s27 = sphi 0, %s24
      %s28 = sphi 0, %s27
      %s44 = sphi 0, %s28
      %s48 = sphi 0, %s48
      %s50 = sphi 0, %s48
      %s51 = sphi 0, %s50
      %s65 = sphi 0, %s51
      %s69 = sphi 0, %s69
      %s71 = sphi 0, %s69
      %s72 = sphi 0, %s71
      %s86 = sphi 0, %s72
      %s90 = sphi 0, %s90
      %s92 = sphi 0, %s90
      %s93 = sphi 0, %s92
      %s107 = sphi 0, %s93
      %s113 = sphi 0, %s115
      %s116 = sphi 0, %s113
      %s117 = sphi 0, %s116
      %s133 = sphi 0, %s117
    $region4: #{tpu_custom_call.1} parent=1 // loop_header_branch
      %17 = sbr.rel (%p15) target = $region8
    $region5: #{tpu_custom_call.1} parent=1 // loop_body
      %s19 = ssub.s32 %s14, 1
      %s20 = ssub.s32 %s14, 2
      %s21 = sadd.s32 %s14, 1
      %s22 = ssub.s32 %s14, %s21
      %p23 = scmp.eq.s32.totalorder %s22, 0
      %s25 = sadd.s32 %s24, 1
      %s26 = scalar_select %p23, %s24, %s25
      %p29 = pneg %p23
      %p30 = scmp.eq.s32.totalorder %s14, 1
      %p31 = por %p29, %p30
      %p32 = scmp.ne.s32.totalorder %s24, %s27
      %p33 = scmp.eq.s32.totalorder %s14, 0
      %p34 = por %p32, %p33
      %p35 = scmp.ne.s32.totalorder %s24, %s27
      %p36 = scmp.eq.s32.totalorder %s19, 1
      %p37 = por %p35, %p36
      %p38 = scmp.ne.s32.totalorder %s27, %s28
      %p39 = scmp.eq.s32.totalorder %s19, 0
      %p40 = por %p38, %p39
      %p41 = scmp.ne.s32.totalorder %s27, %s28
      %p42 = scmp.eq.s32.totalorder %s20, 1
      %p43 = por %p41, %p42
      %p45 = scmp.ne.s32.totalorder %s28, %s44
      %p46 = scmp.eq.s32.totalorder %s20, 0
      %p47 = por %p45, %p46
      %s49 = sadd.s32 %s48, 1
      %p52 = scmp.eq.s32.totalorder %s14, 1
      %p53 = scmp.ne.s32.totalorder %s48, %s50
      %p54 = scmp.eq.s32.totalorder %s14, 0
      %p55 = por %p53, %p54
      %p56 = scmp.ne.s32.totalorder %s48, %s50
      %p57 = scmp.eq.s32.totalorder %s19, 1
      %p58 = por %p56, %p57
      %p59 = scmp.ne.s32.totalorder %s50, %s51
      %p60 = scmp.eq.s32.totalorder %s19, 0
      %p61 = por %p59, %p60
      %p62 = scmp.ne.s32.totalorder %s50, %s51
      %p63 = scmp.eq.s32.totalorder %s20, 1
      %p64 = por %p62, %p63
      %p66 = scmp.ne.s32.totalorder %s51, %s65
      %p67 = scmp.eq.s32.totalorder %s20, 0
      %p68 = por %p66, %p67
      %s70 = sadd.s32 %s69, 1
      %p73 = scmp.eq.s32.totalorder %s14, 1
      %p74 = scmp.ne.s32.totalorder %s69, %s71
      %p75 = scmp.eq.s32.totalorder %s14, 0
      %p76 = por %p74, %p75
      %p77 = scmp.ne.s32.totalorder %s69, %s71
      %p78 = scmp.eq.s32.totalorder %s19, 1
      %p79 = por %p77, %p78
      %p80 = scmp.ne.s32.totalorder %s71, %s72
      %p81 = scmp.eq.s32.totalorder %s19, 0
      %p82 = por %p80, %p81
      %p83 = scmp.ne.s32.totalorder %s71, %s72
      %p84 = scmp.eq.s32.totalorder %s20, 1
      %p85 = por %p83, %p84
      %p87 = scmp.ne.s32.totalorder %s72, %s86
      %p88 = scmp.eq.s32.totalorder %s20, 0
      %p89 = por %p87, %p88
      %s91 = sadd.s32 %s90, 1
      %p94 = scmp.eq.s32.totalorder %s14, 1
      %p95 = scmp.ne.s32.totalorder %s90, %s92
      %p96 = scmp.eq.s32.totalorder %s14, 0
      %p97 = por %p95, %p96
      %p98 = scmp.ne.s32.totalorder %s90, %s92
      %p99 = scmp.eq.s32.totalorder %s19, 1
      %p100 = por %p98, %p99
      %p101 = scmp.ne.s32.totalorder %s92, %s93
      %p102 = scmp.eq.s32.totalorder %s19, 0
      %p103 = por %p101, %p102
      %p104 = scmp.ne.s32.totalorder %s92, %s93
      %p105 = scmp.eq.s32.totalorder %s20, 1
      %p106 = por %p104, %p105
      %p108 = scmp.ne.s32.totalorder %s93, %s107
      %p109 = scmp.eq.s32.totalorder %s20, 0
      %p110 = por %p108, %p109
      %s111 = ssub.s32 %s14, %s21
      %p112 = scmp.eq.s32.totalorder %s111, 0
      %s114 = sadd.s32 %s113, 1
      %s115 = scalar_select %p112, %s113, %s114
      %p118 = pneg %p112
      %p119 = scmp.eq.s32.totalorder %s14, 1
      %p120 = por %p118, %p119
      %p121 = scmp.ne.s32.totalorder %s113, %s116
      %p122 = scmp.eq.s32.totalorder %s14, 0
      %p123 = por %p121, %p122
      %p124 = scmp.ne.s32.totalorder %s113, %s116
      %p125 = scmp.eq.s32.totalorder %s19, 1
      %p126 = por %p124, %p125
      %p127 = scmp.ne.s32.totalorder %s116, %s117
      %p128 = scmp.eq.s32.totalorder %s19, 0
      %p129 = por %p127, %p128
      %p130 = scmp.ne.s32.totalorder %s116, %s117
      %p131 = scmp.eq.s32.totalorder %s20, 1
      %p132 = por %p130, %p131
      %p134 = scmp.ne.s32.totalorder %s117, %s133
      %p135 = scmp.eq.s32.totalorder %s20, 0
      %p136 = por %p134, %p135
      %p137 = scmp.le.s32.totalorder 1, %s14
      %p138 = scmp.lt.s32.totalorder %s14, 3
      %p139 = pnand %p137, %p138
      %p140 = pneg %p139
      // Predicated region
      $region9: #{tpu_custom_call.1} parent=5 // pred_check
        _
      $region10: #{tpu_custom_call.1} parent=5 // pred_check_branch
        %142 = sbr.rel (%p139) target = $region12
      $region11: #{tpu_custom_call.1} parent=5 // pred_region
        %s143 = ssub.s32 %s14, 1
        // Predicated region
        $region13: #{tpu_custom_call.1} parent=11 // pred_check
          %p144 = pneg %p61
        $region14: #{tpu_custom_call.1} parent=11 // pred_check_branch
          %146 = sbr.rel (%p144) target = $region16
        $region15: #{tpu_custom_call.1} parent=11 // pred_region
          %s148 = ssub.s32 64, 64
          %149 = vsyncadd [#allocation5], %s148
          %s151 = sshll.u32 [#allocation4], 4
          %s152 = int_to_ptr.vmem [resolvable:$true] %s151
          %154 = dma.hbm_to_vmem [thread:$0]  %s1, 64, %s152, [#allocation5]
        $region16: #{tpu_custom_call.1} parent=11 // pred_fallthru
          _
        // Predicated region
        $region17: #{tpu_custom_call.1} parent=11 // pred_check
          %p155 = pneg %p82
        $region18: #{tpu_custom_call.1} parent=11 // pred_check_branch
          %157 = sbr.rel (%p155) target = $region20
        $region19: #{tpu_custom_call.1} parent=11 // pred_region
          _
        $region20: #{tpu_custom_call.1} parent=11 // pred_fallthru
          _
        // Predicated region
        $region21: #{tpu_custom_call.1} parent=11 // pred_check
          %p158 = pneg %p103
        $region22: #{tpu_custom_call.1} parent=11 // pred_check_branch
          %160 = sbr.rel (%p158) target = $region24
        $region23: #{tpu_custom_call.1} parent=11 // pred_region
          _
        $region24: #{tpu_custom_call.1} parent=11 // pred_fallthru
          _
      $region12: #{tpu_custom_call.1} parent=5 // pred_fallthru
        _
      %p161 = scmp.lt.s32.totalorder %s14, 2
      // Predicated region
      $region25: #{tpu_custom_call.1} parent=5 // pred_check
        %p162 = pneg %p161
      $region26: #{tpu_custom_call.1} parent=5 // pred_check_branch
        %164 = sbr.rel (%p162) target = $region28
      $region27: #{tpu_custom_call.1} parent=5 // pred_region
        // Predicated region
        $region29: #{tpu_custom_call.1} parent=27 // pred_check
          %p165 = pneg %p34
        $region30: #{tpu_custom_call.1} parent=27 // pred_check_branch
          %167 = sbr.rel (%p165) target = $region32
        $region31: #{tpu_custom_call.1} parent=27 // pred_region
          %p168 = scmp.lt.s32.totalorder %s14, 1
          %s169 = scalar_select %p168, %s14, 1
          %s170 = smul.addr %s169, 2
          %s171 = smul.addr %s170, 4
          %s172 = scalar_lea.vmem %s0, %s171
        $region32: #{tpu_custom_call.1} parent=27 // pred_fallthru
          _
      $region28: #{tpu_custom_call.1} parent=5 // pred_fallthru
        _
      %p173 = scmp.le.s32.totalorder 1, %s14
      %p174 = scmp.lt.s32.totalorder %s14, 3
      %p175 = pnand %p173, %p174
      %p176 = pneg %p175
      // Predicated region
      $region33: #{tpu_custom_call.1} parent=5 // pred_check
        _
      $region34: #{tpu_custom_call.1} parent=5 // pred_check_branch
        %178 = sbr.rel (%p175) target = $region36
      $region35: #{tpu_custom_call.1} parent=5 // pred_region
        %s179 = ssub.s32 %s14, 1
        // Predicated region
        $region37: #{tpu_custom_call.1} parent=35 // pred_check
          %p180 = pneg %p61
        $region38: #{tpu_custom_call.1} parent=35 // pred_check_branch
          %182 = sbr.rel (%p180) target = $region40
        $region39: #{tpu_custom_call.1} parent=35 // pred_region
          %183 = dma.done [#allocation5], 64
        $region40: #{tpu_custom_call.1} parent=35 // pred_fallthru
          _
        %p184 = scmp.lt.s32.totalorder %s19, 1
        %s185 = scalar_select %p184, %s19, 1
        %s186 = smul.addr %s185, 2
        %s187 = smul.addr %s186, 4
        %s188 = scalar_lea.vmem %s0, %s187
        %p189 = pneg %p40
        %p190 = pneg %p37
        %p191 = pneg %p61
        %p192 = pneg %p58
        %p193 = pneg %p82
        %p194 = pneg %p79
        %p195 = pneg %p103
        %p196 = pneg %p100
        %p197 = pneg %p129
        %p198 = pneg %p126
        %s199 = sand.u32 %s116, 1
        %s200 = scalar_lea.sflag [#allocation6], %s199
        %s201 = sand.u32 %s116, 1
        %s202 = smul.addr %s201, 24
        %s203 = scalar_lea.vmem [#allocation7], %s202
        %p204 = scmp.lt.s32.totalorder %s19, 1
        %s205 = scalar_select %p204, %s19, 1
        %s206 = smul.addr %s205, 2
        %s207 = smul.addr %s206, 4
        %s208 = scalar_lea.vmem %s0, %s207
        %210 = vst [vmem:[#allocation2] sm:$0xff] 0.0
        %vm211 = vcmask 1043456
        %vm212 = vcmask 588804
        %vm213 = vmor %vm212, %vm211
        %214 = vst.msk [vmem:[#allocation2 + $0x8] sm:$0xff] %vm213, 0.0
        %v215 = vld [vmem:[%s208] sm:$0xf]
        %217 = vrot.lane.b32.xlu0 %v215, 25
        %v218 = vpop.permute.xlu0 %217
        %vm220 = vcmask 330952
        %221 = vst.msk [vmem:[#allocation2] sm:$0xf] %vm220, %v218
        %v222 = vld [vmem:[%s208] sm:$0xf]
        %224 = vrot.lane.b32.xlu0 %v222, 33
        %v225 = vpop.permute.xlu0 %224
        %vm227 = vcmask 527752
        %228 = vst.msk [vmem:[#allocation2] sm:$0xf] %vm227, %v225
        %v229 = vld [vmem:[%s208] sm:$0xf]
        %231 = vrot.lane.b32.xlu0 %v229, 41
        %v232 = vpop.permute.xlu0 %231
        %vm234 = vcmask 724552
        %235 = vst.msk [vmem:[#allocation2] sm:$0xf] %vm234, %v232
        %v236 = vld [vmem:[%s208] sm:$0xf]
        %238 = vrot.lane.b32.xlu0 %v236, 49
        %v239 = vpop.permute.xlu0 %238
        %vm241 = vcmask 921352
        %242 = vst.msk [vmem:[#allocation2] sm:$0xf] %vm241, %v239
        %v243 = vld [vmem:[%s208] sm:$0xf]
        %245 = vrot.lane.b32.xlu0 %v243, 57
        %v246 = vpop.permute.xlu0 %245
        %v247 = vrot.slane %v246, 4
        %vm248 = vcmask 465920
        %v249 = vsel %vm248, %v247, %v246
        %vm251 = vcmask 1044424
        %vm252 = vcmask 72708
        %vm253 = vmor %vm252, %vm251
        %254 = vst.msk [vmem:[#allocation2] sm:$0xff] %vm253, %v249
        %v255 = vld [vmem:[%s208] sm:$0xf]
        %257 = vrot.lane.b32.xlu0 %v255, 65
        %v258 = vpop.permute.xlu0 %257
        %vm260 = vcmask 265352
        %261 = vst.msk [vmem:[#allocation2 + $0x4] sm:$0xf] %vm260, %v258
        %v262 = vld [vmem:[%s208] sm:$0xf]
        %264 = vrot.lane.b32.xlu0 %v262, 73
        %v265 = vpop.permute.xlu0 %264
        %vm267 = vcmask 462152
        %268 = vst.msk [vmem:[#allocation2 + $0x4] sm:$0xf] %vm267, %v265
        %v269 = vld [vmem:[%s208] sm:$0xf]
        %271 = vrot.lane.b32.xlu0 %v269, 81
        %v272 = vpop.permute.xlu0 %271
        %vm274 = vcmask 658952
        %275 = vst.msk [vmem:[#allocation2 + $0x4] sm:$0xf] %vm274, %v272
        %v276 = vld [vmem:[%s208 + $0x4] sm:$0xf]
        %278 = vrot.lane.b32.xlu0 %v276, 89
        %v279 = vpop.permute.xlu0 %278
        %vm281 = vcmask 855752
        %282 = vst.msk [vmem:[#allocation2 + $0x4] sm:$0xf] %vm281, %v279
        %v283 = vld [vmem:[%s208 + $0x4] sm:$0xf]
        %285 = vrot.lane.b32.xlu0 %v283, 97
        %v286 = vpop.permute.xlu0 %285
        %v287 = vrot.slane %v286, 4
        %vm288 = vcmask 793600
        %v289 = vsel %vm288, %v287, %v286
        %vm291 = vcmask 1044360
        %vm292 = vcmask 7172
        %vm293 = vmor %vm292, %vm291
        %294 = vst.msk [vmem:[#allocation2 + $0x4] sm:$0xff] %vm293, %v289
        %v295 = vld [vmem:[%s208 + $0x4] sm:$0xf]
        %297 = vrot.lane.b32.xlu0 %v295, 105
        %v298 = vpop.permute.xlu0 %297
        %vm300 = vcmask 199752
        %301 = vst.msk [vmem:[#allocation2 + $0x8] sm:$0xf] %vm300, %v298
        %v302 = vld [vmem:[%s208 + $0x4] sm:$0xf]
        %304 = vrot.lane.b32.xlu0 %v302, 113
        %v305 = vpop.permute.xlu0 %304
        %vm307 = vcmask 396552
        %308 = vst.msk [vmem:[#allocation2 + $0x8] sm:$0xf] %vm307, %v305
        %v309 = vld [vmem:[%s208 + $0x4] sm:$0xf]
        %311 = vrot.lane.b32.xlu0 %v309, 121
        %v312 = vpop.permute.xlu0 %311
        %vm314 = vcmask 593352
        %315 = vst.msk [vmem:[#allocation2 + $0x8] sm:$0xf] %vm314, %v312
        %v316 = vld [vmem:[%s208 + $0x4] sm:$0xf]
        %318 = vrot.lane.b32.xlu0 %v316, 1
        %v319 = vpop.permute.xlu0 %318
        %vm321 = vcmask 790152
        %322 = vst.msk [vmem:[#allocation2 + $0x8] sm:$0xf] %vm321, %v319
        %v323 = vld [vmem:[%s208 + $0x4] sm:$0xf]
        %325 = vrot.lane.b32.xlu0 %v323, 9
        %v326 = vpop.permute.xlu0 %325
        %vm328 = vcmask 986952
        %329 = vst.msk [vmem:[#allocation2 + $0x8] sm:$0xf] %vm328, %v326
        %v330 = vld [vmem:[%s208 + $0x4] sm:$0xf]
        %332 = vrot.lane.b32.xlu0 %v330, 17
        %v333 = vpop.permute.xlu0 %332
        %vm335 = vcmask 134152
        %336 = vst.msk [vmem:[#allocation2 + $0xc] sm:$0xf] %vm335, %v333
        %v337 = vld [vmem:[#allocation2] sm:$0xff]
        %v338 = vld [vmem:[#allocation2 + $0x8] sm:$0xf]
        %v340 = vcombine.high %v337, %v337
        %v342 = vpack.c.bf16 %v337, %v337
        %v343 = vpack.c.bf16 %v340, %v340
        %v344 = vpack.c.bf16 %v338, %v338
        %v348 = vunpack.c.l.b16 %v342
        %v349 = vunpack.c.l.b16 %v343
        %v350 = vunpack.c.l.b16 %v344
        %v351 = vpack.c.b16 %v349, %v348
        %v352 = vpack.c.b16 %v350, %v350
        %355 = vst [vmem:[#allocation3] sm:$0x33] %v351
        %356 = vst [vmem:[#allocation3 + $0x8] sm:$0x3] %v352
        %v357 = vld [vmem:[#allocation2] sm:$0xff]
        %v358 = vld [vmem:[#allocation2 + $0x8] sm:$0xff]
        %v361 = vcombine.high %v357, %v357
        %v362 = vcombine.high %v358, %v358
        %v365 = vpack.c.bf16 %v357, %v357
        %v366 = vpack.c.bf16 %v361, %v361
        %v367 = vpack.c.bf16 %v358, %v358
        %v368 = vpack.c.bf16 %v362, %v362
        %v373 = vunpack.c.l.b16 %v365
        %v374 = vunpack.c.l.b16 %v366
        %v375 = vunpack.c.l.b16 %v367
        %v376 = vunpack.c.l.b16 %v368
        %v377 = vpack.c.b16 %v374, %v373
        %v378 = vpack.c.b16 %v376, %v375
        %v379 = vrot.slane %v377, 6
        %v380 = vrot.slane %v378, 6
        %381 = vrot.lane.b32.xlu0 %v379, 127
        %v382 = vpop.permute.xlu0 %381
        %383 = vrot.lane.b32.xlu0 %v380, 127
        %v384 = vpop.permute.xlu0 %383
        %v385 = vrot.slane %v382, 4
        %v386 = vrot.slane %v384, 4
        %vm387 = vcmask 1043456
        %v388 = vsel %vm387, %v385, %v386
        %vm389 = vcmask 1039360
        %v390 = vsel %vm389, %v382, %v388
        %v391 = vsel %vm389, %v384, %v386
        %394 = vst [vmem:[#allocation3] sm:$0xcc] %v390
        %395 = vst [vmem:[#allocation3 + $0x8] sm:$0xc] %v391
        %v396 = vld [vmem:[#allocation2] sm:$0xff]
        %v397 = vld [vmem:[#allocation2 + $0x8] sm:$0xff]
        %v400 = vcombine.high %v396, %v396
        %v401 = vcombine.high %v397, %v397
        %v404 = vpack.c.bf16 %v396, %v396
        %v405 = vpack.c.bf16 %v400, %v400
        %v406 = vpack.c.bf16 %v397, %v397
        %v407 = vpack.c.bf16 %v401, %v401
        %v412 = vunpack.c.l.b16 %v404
        %v413 = vunpack.c.l.b16 %v405
        %v414 = vunpack.c.l.b16 %v406
        %v415 = vunpack.c.l.b16 %v407
        %v416 = vpack.c.b16 %v413, %v412
        %v417 = vpack.c.b16 %v415, %v414
        %418 = vrot.lane.b32.xlu0 %v416, 126
        %v419 = vpop.permute.xlu0 %418
        %420 = vrot.lane.b32.xlu0 %v417, 126
        %v421 = vpop.permute.xlu0 %420
        %v422 = vrot.slane %v419, 4
        %v423 = vrot.slane %v421, 4
        %v424 = vsel %vm387, %v422, %v423
        %vm425 = vcmask 1031168
        %v426 = vsel %vm425, %v419, %v424
        %v427 = vsel %vm425, %v421, %v423
        %430 = vst [vmem:[#allocation3 + $0xc] sm:$0x33] %v426
        %431 = vst [vmem:[#allocation3 + $0x14] sm:$0x3] %v427
        %v432 = vld [vmem:[#allocation2] sm:$0xff]
        %v433 = vld [vmem:[#allocation2 + $0x8] sm:$0xff]
        %v436 = vcombine.high %v432, %v432
        %v437 = vcombine.high %v433, %v433
        %v440 = vpack.c.bf16 %v432, %v432
        %v441 = vpack.c.bf16 %v436, %v436
        %v442 = vpack.c.bf16 %v433, %v433
        %v443 = vpack.c.bf16 %v437, %v437
        %v448 = vunpack.c.l.b16 %v440
        %v449 = vunpack.c.l.b16 %v441
        %v450 = vunpack.c.l.b16 %v442
        %v451 = vunpack.c.l.b16 %v443
        %v452 = vpack.c.b16 %v449, %v448
        %v453 = vpack.c.b16 %v451, %v450
        %v454 = vrot.slane %v452, 6
        %v455 = vrot.slane %v453, 6
        %456 = vrot.lane.b32.xlu0 %v454, 104
        %v457 = vpop.permute.xlu0 %456
        %458 = vrot.lane.b32.xlu0 %v455, 104
        %v459 = vpop.permute.xlu0 %458
        %v460 = vrot.slane %v457, 4
        %v461 = vrot.slane %v459, 4
        %v462 = vsel %vm387, %v460, %v461
        %vm463 = vcmask 850944
        %v464 = vsel %vm463, %v457, %v462
        %v465 = vsel %vm463, %v459, %v461
        %468 = vst [vmem:[#allocation3 + $0xc] sm:$0xcc] %v464
        %469 = vst [vmem:[#allocation3 + $0x14] sm:$0xc] %v465
        %v470 = vld [vmem:[#allocation2] sm:$0xff]
        %v471 = vld [vmem:[#allocation2 + $0x8] sm:$0xff]
        %v474 = vcombine.high %v470, %v470
        %v475 = vcombine.high %v471, %v471
        %v478 = vpack.c.bf16 %v470, %v470
        %v479 = vpack.c.bf16 %v474, %v474
        %v480 = vpack.c.bf16 %v471, %v471
        %v481 = vpack.c.bf16 %v475, %v475
        %v486 = vunpack.c.l.b16 %v478
        %v487 = vunpack.c.l.b16 %v479
        %v488 = vunpack.c.l.b16 %v480
        %v489 = vunpack.c.l.b16 %v481
        %v490 = vpack.c.b16 %v487, %v486
        %v491 = vpack.c.b16 %v489, %v488
        %492 = vrot.lane.b32.xlu0 %v490, 103
        %v493 = vpop.permute.xlu0 %492
        %494 = vrot.lane.b32.xlu0 %v491, 103
        %v495 = vpop.permute.xlu0 %494
        %v496 = vrot.slane %v493, 4
        %v497 = vrot.slane %v495, 4
        %v498 = vsel %vm387, %v496, %v497
        %vm499 = vcmask 842752
        %v500 = vsel %vm499, %v493, %v498
        %v501 = vsel %vm499, %v495, %v497
        %504 = vst [vmem:[#allocation3 + $0x18] sm:$0x33] %v500
        %505 = vst [vmem:[#allocation3 + $0x20] sm:$0x3] %v501
        %v506 = vld [vmem:[#allocation2] sm:$0xff]
        %v507 = vld [vmem:[#allocation2 + $0x8] sm:$0xff]
        %v510 = vcombine.high %v506, %v506
        %v511 = vcombine.high %v507, %v507
        %v514 = vpack.c.bf16 %v506, %v506
        %v515 = vpack.c.bf16 %v510, %v510
        %v516 = vpack.c.bf16 %v507, %v507
        %v517 = vpack.c.bf16 %v511, %v511
        %v522 = vunpack.c.l.b16 %v514
        %v523 = vunpack.c.l.b16 %v515
        %v524 = vunpack.c.l.b16 %v516
        %v525 = vunpack.c.l.b16 %v517
        %v526 = vpack.c.b16 %v523, %v522
        %v527 = vpack.c.b16 %v525, %v524
        %v528 = vrot.slane %v526, 6
        %v529 = vrot.slane %v527, 6
        %530 = vrot.lane.b32.xlu0 %v528, 102
        %v531 = vpop.permute.xlu0 %530
        %532 = vrot.lane.b32.xlu0 %v529, 102
        %v533 = vpop.permute.xlu0 %532
        %v534 = vrot.slane %v531, 4
        %v535 = vrot.slane %v533, 4
        %v536 = vsel %vm387, %v534, %v535
        %vm537 = vcmask 834560
        %v538 = vsel %vm537, %v531, %v536
        %v539 = vsel %vm537, %v533, %v535
        %542 = vst [vmem:[#allocation3 + $0x18] sm:$0xcc] %v538
        %543 = vst [vmem:[#allocation3 + $0x20] sm:$0xc] %v539
        %v544 = vld [vmem:[#allocation2] sm:$0xff]
        %v545 = vld [vmem:[#allocation2 + $0x8] sm:$0xff]
        %v548 = vcombine.high %v544, %v544
        %v549 = vcombine.high %v545, %v545
        %v552 = vpack.c.bf16 %v544, %v544
        %v553 = vpack.c.bf16 %v548, %v548
        %v554 = vpack.c.bf16 %v545, %v545
        %v555 = vpack.c.bf16 %v549, %v549
        %v560 = vunpack.c.l.b16 %v552
        %v561 = vunpack.c.l.b16 %v553
        %v562 = vunpack.c.l.b16 %v554
        %v563 = vunpack.c.l.b16 %v555
        %v564 = vpack.c.b16 %v561, %v560
        %v565 = vpack.c.b16 %v563, %v562
        %566 = vrot.lane.b32.xlu0 %v564, 80
        %v567 = vpop.permute.xlu0 %566
        %568 = vrot.lane.b32.xlu0 %v565, 80
        %v569 = vpop.permute.xlu0 %568
        %v570 = vrot.slane %v567, 4
        %v571 = vrot.slane %v569, 4
        %v572 = vsel %vm387, %v570, %v571
        %vm573 = vcmask 654336
        %v574 = vsel %vm573, %v567, %v572
        %v575 = vsel %vm573, %v569, %v571
        %578 = vst [vmem:[#allocation3 + $0x24] sm:$0x33] %v574
        %579 = vst [vmem:[#allocation3 + $0x2c] sm:$0x3] %v575
        %v580 = vld [vmem:[#allocation2] sm:$0xff]
        %v581 = vld [vmem:[#allocation2 + $0x8] sm:$0xff]
        %v584 = vcombine.high %v580, %v580
        %v585 = vcombine.high %v581, %v581
        %v588 = vpack.c.bf16 %v580, %v580
        %v589 = vpack.c.bf16 %v584, %v584
        %v590 = vpack.c.bf16 %v581, %v581
        %v591 = vpack.c.bf16 %v585, %v585
        %v596 = vunpack.c.l.b16 %v588
        %v597 = vunpack.c.l.b16 %v589
        %v598 = vunpack.c.l.b16 %v590
        %v599 = vunpack.c.l.b16 %v591
        %v600 = vpack.c.b16 %v597, %v596
        %v601 = vpack.c.b16 %v599, %v598
        %v602 = vrot.slane %v600, 6
        %v603 = vrot.slane %v601, 6
        %604 = vrot.lane.b32.xlu0 %v602, 79
        %v605 = vpop.permute.xlu0 %604
        %606 = vrot.lane.b32.xlu0 %v603, 79
        %v607 = vpop.permute.xlu0 %606
        %v608 = vrot.slane %v605, 4
        %v609 = vrot.slane %v607, 4
        %v610 = vsel %vm387, %v608, %v609
        %vm611 = vcmask 646144
        %v612 = vsel %vm611, %v605, %v610
        %v613 = vsel %vm611, %v607, %v609
        %616 = vst [vmem:[#allocation3 + $0x24] sm:$0xcc] %v612
        %617 = vst [vmem:[#allocation3 + $0x2c] sm:$0xc] %v613
        %v618 = vld [vmem:[#allocation2] sm:$0xff]
        %v619 = vld [vmem:[#allocation2 + $0x8] sm:$0xff]
        %v622 = vcombine.high %v618, %v618
        %v623 = vcombine.high %v619, %v619
        %v626 = vpack.c.bf16 %v618, %v618
        %v627 = vpack.c.bf16 %v622, %v622
        %v628 = vpack.c.bf16 %v619, %v619
        %v629 = vpack.c.bf16 %v623, %v623
        %v634 = vunpack.c.l.b16 %v626
        %v635 = vunpack.c.l.b16 %v627
        %v636 = vunpack.c.l.b16 %v628
        %v637 = vunpack.c.l.b16 %v629
        %v638 = vpack.c.b16 %v635, %v634
        %v639 = vpack.c.b16 %v637, %v636
        %640 = vrot.lane.b32.xlu0 %v638, 78
        %v641 = vpop.permute.xlu0 %640
        %642 = vrot.lane.b32.xlu0 %v639, 78
        %v643 = vpop.permute.xlu0 %642
        %v644 = vrot.slane %v641, 4
        %v645 = vrot.slane %v643, 4
        %v646 = vsel %vm387, %v644, %v645
        %vm647 = vcmask 637952
        %v648 = vsel %vm647, %v641, %v646
        %v649 = vsel %vm647, %v643, %v645
        %652 = vst [vmem:[#allocation3 + $0x30] sm:$0x33] %v648
        %653 = vst [vmem:[#allocation3 + $0x38] sm:$0x3] %v649
        %v654 = vld [vmem:[#allocation4] sm:$0xf]
        %v655 = vld [vmem:[#allocation3] sm:$0xff]
        %v656 = vld [vmem:[#allocation3 + $0x8] sm:$0xf]
        %v657 = vld [vmem:[#allocation3 + $0xc] sm:$0xff]
        %v658 = vld [vmem:[#allocation3 + $0x14] sm:$0xf]
        %v659 = vld [vmem:[#allocation3 + $0x18] sm:$0xff]
        %v660 = vld [vmem:[#allocation3 + $0x20] sm:$0xf]
        %v661 = vld [vmem:[#allocation3 + $0x24] sm:$0xff]
        %v662 = vld [vmem:[#allocation3 + $0x2c] sm:$0xf]
        %v663 = vld [vmem:[#allocation3 + $0x30] sm:$0x33]
        %v664 = vld [vmem:[#allocation3 + $0x38] sm:$0x3]
        %v675 = vunpack.c.l.b16 %v655
        %v676 = vunpack.c.h.b16 %v655
        %v677 = vunpack.c.l.b16 %v656
        %v678 = vunpack.c.l.b16 %v657
        %v679 = vunpack.c.h.b16 %v657
        %v680 = vunpack.c.l.b16 %v658
        %v681 = vunpack.c.l.b16 %v659
        %v682 = vunpack.c.h.b16 %v659
        %v683 = vunpack.c.l.b16 %v660
        %v684 = vunpack.c.l.b16 %v661
        %v685 = vunpack.c.h.b16 %v661
        %v686 = vunpack.c.l.b16 %v662
        %v687 = vunpack.c.l.b16 %v663
        %v688 = vunpack.c.h.b16 %v663
        %v689 = vunpack.c.l.b16 %v664
        %v690 = vpack.c.b16 %v678, %v675
        %v691 = vpack.c.b16 %v679, %v676
        %v692 = vpack.c.b16 %v680, %v677
        %v693 = vpack.c.b16 %v684, %v681
        %v694 = vpack.c.b16 %v685, %v682
        %v695 = vpack.c.b16 %v686, %v683
        %v696 = vpack.c.b16 %v687, %v687
        %v697 = vpack.c.b16 %v688, %v688
        %v698 = vpack.c.b16 %v689, %v689
        %vm705 = vcmask 293888
        %v707 = vsel %vm705, %v654, 0
        %vm709 = vcmask 1041408
        %v711 = vsel %vm709, %v696, 0
        %v714 = vsel %vm709, %v697, 0
        %v717 = vsel %vm709, %v698, 0
        %719 = vmatprep.subr.bf16.mxu0 0
        %720 = vmatpush1.bf16.msra.mxu0 0
        %721 = vmatprep.subr.bf16.mxu0 0
        %722 = vmatpush1.bf16.msra.mxu0 0
        %723 = vmatprep.subr.bf16.mxu0 0
        %724 = vmatpush1.bf16.msra.mxu0 0
        %725 = vmatprep.subr.bf16.mxu0 0
        %726 = vmatpush1.bf16.msra.mxu0 0
        %727 = vmatprep.subr.bf16.mxu0 0
        %728 = vmatpush1.bf16.msra.mxu0 0
        %729 = vmatprep.subr.bf16.mxu0 %v714
        %730 = vmatpush1.bf16.msra.mxu0 %v711
        %731 = vmatprep.subr.bf16.mxu0 %v694
        %732 = vmatpush1.bf16.msra.mxu0 %v693
        %733 = vmatprep.subr.bf16.mxu0 %v691
        %734 = vmatpush1.bf16.msra.mxu0 %v690
        %735 = vmatprep.subr.bf16.mxu0 0
        %736 = vmatpush2.bf16.msra.mxu0 0
        %737 = vmatprep.subr.bf16.mxu0 0
        %738 = vmatpush2.bf16.msra.mxu0 0
        %739 = vmatprep.subr.bf16.mxu0 0
        %740 = vmatpush2.bf16.msra.mxu0 0
        %741 = vmatprep.subr.bf16.mxu0 0
        %742 = vmatpush2.bf16.msra.mxu0 0
        %743 = vmatprep.subr.bf16.mxu0 0
        %744 = vmatpush2.bf16.msra.mxu0 0
        %745 = vmatprep.subr.bf16.mxu0 0
        %746 = vmatpush2.bf16.msra.mxu0 0
        %747 = vmatprep.subr.bf16.mxu0 0
        %748 = vmatpush2.bf16.msra.mxu0 0
        %749 = vmatprep.subr.bf16.mxu0 0
        %750 = vmatpush2.bf16.msra.mxu0 0
        %751 = vmatprep.mubr.bf16.mxu0 0
        %752 = vmatmul.mubr.bf16.gmra.mxu0 %v707
        %v753 = vpop.f32.mrf.mxu0
        %v754 = vadd.f32 0.0, %v753
        %v755 = vpop.f32.mrf.mxu0
        %v756 = vadd.f32 0.0, %v755
        %v757 = vpop.f32.mrf.mxu0
        %v758 = vpop.f32.mrf.mxu0
        %759 = vdwg.mxu0
        %760 = vmatprep.subr.bf16.mxu0 0
        %761 = vmatpush1.bf16.msra.mxu0 0
        %762 = vmatprep.subr.bf16.mxu0 0
        %763 = vmatpush1.bf16.msra.mxu0 0
        %764 = vmatprep.subr.bf16.mxu0 0
        %765 = vmatpush1.bf16.msra.mxu0 0
        %766 = vmatprep.subr.bf16.mxu0 0
        %767 = vmatpush1.bf16.msra.mxu0 0
        %768 = vmatprep.subr.bf16.mxu0 0
        %769 = vmatpush1.bf16.msra.mxu0 0
        %770 = vmatprep.subr.bf16.mxu0 0
        %771 = vmatpush1.bf16.msra.mxu0 %v717
        %772 = vmatprep.subr.bf16.mxu0 0
        %773 = vmatpush1.bf16.msra.mxu0 %v695
        %774 = vmatprep.subr.bf16.mxu0 0
        %775 = vmatpush1.bf16.msra.mxu0 %v692
        %776 = vmatprep.subr.bf16.mxu0 0
        %777 = vmatpush2.bf16.msra.mxu0 0
        %778 = vmatprep.subr.bf16.mxu0 0
        %779 = vmatpush2.bf16.msra.mxu0 0
        %780 = vmatprep.subr.bf16.mxu0 0
        %781 = vmatpush2.bf16.msra.mxu0 0
        %782 = vmatprep.subr.bf16.mxu0 0
        %783 = vmatpush2.bf16.msra.mxu0 0
        %784 = vmatprep.subr.bf16.mxu0 0
        %785 = vmatpush2.bf16.msra.mxu0 0
        %786 = vmatprep.subr.bf16.mxu0 0
        %787 = vmatpush2.bf16.msra.mxu0 0
        %788 = vmatprep.subr.bf16.mxu0 0
        %789 = vmatpush2.bf16.msra.mxu0 0
        %790 = vmatprep.subr.bf16.mxu0 0
        %791 = vmatpush2.bf16.msra.mxu0 0
        %792 = vmatprep.mubr.bf16.mxu0 0
        %793 = vmatmul.mubr.bf16.gmra.mxu0 %v707
        %v794 = vpop.f32.mrf.mxu0
        %v795 = vadd.f32 0.0, %v794
        %v796 = vpop.f32.mrf.mxu0
        %v797 = vpop.f32.mrf.mxu0
        %v798 = vpop.f32.mrf.mxu0
        %799 = vdwg.mxu0
        %v800 = vld [vmem:[%s2] sm:$0xff]
        %802 = vset.pattern.permute.xlu0 0
        %803 = vperm.xlu0 %802, %v800
        %v804 = vpop.permute.xlu0 %803
        %v806 = vmul.f32 %v754, %v804
        %v807 = vmul.f32 %v756, %v804
        %v808 = vmul.f32 %v795, %v804
        %v809 = vld [vmem:[%s3] sm:$0xff]
        %811 = vset.pattern.permute.xlu0 0
        %812 = vperm.xlu0 %811, %v809
        %v813 = vpop.permute.xlu0 %812
        %v815 = vadd.f32 %v806, %v813
        %v816 = vadd.f32 %v807, %v813
        %v817 = vadd.f32 %v808, %v813
        %v818 = vsub.f32 0.0, %v815
        %v819 = vsub.f32 0.0, %v816
        %v820 = vsub.f32 0.0, %v817
        %v821 = vmul.f32 %v818, 1.442695
        %v822 = vpow.pop %v821
        %v823 = vmul.f32 %v819, 1.442695
        %v824 = vpow.pop %v823
        %v825 = vmul.f32 %v820, 1.442695
        %v826 = vpow.pop %v825
        %v827 = vadd.f32 %v822, 1.0
        %v828 = vadd.f32 %v824, 1.0
        %v829 = vadd.f32 %v826, 1.0
        %v830 = vrcp.pop %v827
        %v831 = vrcp.pop %v828
        %v832 = vrcp.pop %v829
        %v833 = vmul.f32 %v815, %v830
        %v834 = vmul.f32 %v816, %v831
        %v835 = vmul.f32 %v817, %v832
        %836 = vst [vmem:[%s203] sm:$0xff] %v833
        %837 = vst [vmem:[%s203 + $0x8] sm:$0xff] %v834
        %838 = vst [vmem:[%s203 + $0x10] sm:$0xff] %v835
        %s839 = sand.u32 %s116, 1
        %s840 = scalar_lea.sflag [#allocation6], %s839
        %s841 = sand.u32 %s116, 1
        %s842 = smul.addr %s841, 24
        %s843 = scalar_lea.vmem [#allocation7], %s842
        // Predicated region
        $region41: #{tpu_custom_call.1} parent=35 // pred_check
          %p844 = pneg %p126
        $region42: #{tpu_custom_call.1} parent=35 // pred_check_branch
          %846 = sbr.rel (%p844) target = $region44
        $region43: #{tpu_custom_call.1} parent=35 // pred_region
          %s848 = ssub.s32 384, 384
          %849 = vsyncadd %s840, %s848
          %s850 = smul.addr %s19, 3
          %s851 = smul.addr %s850, 128
          %s852 = scalar_lea.hbm %s4, %s851
          %s854 = sshll.u32 %s843, 4
          %s855 = int_to_ptr.vmem [resolvable:$true] %s854
          %857 = dma.vmem_to_hbm [thread:$0]  %s855, 384, %s852, %s840
        $region44: #{tpu_custom_call.1} parent=35 // pred_fallthru
          _
      $region36: #{tpu_custom_call.1} parent=5 // pred_fallthru
        _
      %p858 = scmp.le.s32.totalorder 2, %s14
      // Predicated region
      $region45: #{tpu_custom_call.1} parent=5 // pred_check
        %p859 = pneg %p858
      $region46: #{tpu_custom_call.1} parent=5 // pred_check_branch
        %861 = sbr.rel (%p859) target = $region48
      $region47: #{tpu_custom_call.1} parent=5 // pred_region
        %s862 = ssub.s32 %s14, 2
        // Predicated region
        $region49: #{tpu_custom_call.1} parent=47 // pred_check
          %p863 = pneg %p132
        $region50: #{tpu_custom_call.1} parent=47 // pred_check_branch
          %865 = sbr.rel (%p863) target = $region52
        $region51: #{tpu_custom_call.1} parent=47 // pred_region
          %s866 = sand.u32 %s117, 1
          %s867 = scalar_lea.sflag [#allocation6], %s866
          %s868 = sand.u32 %s117, 1
          %s869 = smul.addr %s868, 24
          %s870 = scalar_lea.vmem [#allocation7], %s869
          %871 = dma.done %s867, 384
        $region52: #{tpu_custom_call.1} parent=47 // pred_fallthru
          _
      $region48: #{tpu_custom_call.1} parent=5 // pred_fallthru
        _
    $region6: #{tpu_custom_call.1} parent=1 // loop_footer
      %s18 = sadd.s32 1, %s14
    $region7: #{tpu_custom_call.1} parent=1 // loop_footer_branch
      %13 = sbr.rel target = $region3
    $region8: #{tpu_custom_call.1} parent=1 // loop_exit
      _
    %872 = vsyncpa [#allocation5], 1
    %s873 = scalar_lea.sflag [#allocation5], 1
    %874 = vsyncpa %s873, 1
    %875 = vsyncpa [#allocation6], 1
    %s876 = scalar_lea.sflag [#allocation6], 1
    %877 = vsyncpa %s876, 1

</llo_original>
